<compile_context>
chip_gen: v5e
topology: v5e:2x2
jax: 0.10.0
libtpu: 0.0.40
codegen_flags: <defaults>
</compile_context>

<pallas_src>
import jax
import jax.numpy as jnp
from jax.experimental import pallas as pl
from jax.experimental.pallas import tpu as pltpu


def _round_up(x, m):
    return ((x + m - 1) // m) * m


def _make_gfp_kernel(k):
    """Kernel over one row tile.

    x_ref:   (tile_rows, k)  f32   k time steps packed per output row
    wp_ref:  (k + 1, hp)     f32   rows 0..k-1: W*2pi in that slot's lanes (zero
                                   elsewhere); row k: phase (0 | pi/2) tiled
    out_ref: (tile_rows, hp) f32   packed [sin | cos] embeddings
    """

    def kernel(x_ref, wp_ref, out_ref):
        x = x_ref[...]                              # (tile_rows, k)
        arg = wp_ref[k:k + 1, :]                    # (1, hp) phase row
        for c in range(k):                          # k exact-f32 VPU FMAs
            arg = arg + x[:, c:c + 1] * wp_ref[c:c + 1, :]
        out_ref[...] = jnp.sin(arg)                 # single fused transcendental

    return kernel


def gaussian_fourier_projection(x, W, *, tile_rows=None):
    """x: (N,) float, W: (H,) float -> (N, 2H) float32.

    Matches torch.cat([sin(x[:,None]*W[None,:]*2*pi),
                       cos(x[:,None]*W[None,:]*2*pi)], dim=-1).
    """
    N = x.shape[0]
    H = W.shape[0]
    two_h = 2 * H

    # ---- choose packing: k logical rows per 128-lane output row -------------
    if two_h < 128 and 128 % two_h == 0:
        k = 128 // two_h
        hp = 128
    else:
        k = 1
        hp = _round_up(two_h, 128)

    # ---- one-time tiny precompute (f32) -------------------------------------
    w32 = W.astype(jnp.float32)
    w_row = jnp.concatenate([w32, w32]) * (2.0 * jnp.pi)                 # (2H,)
    p_row = jnp.concatenate([jnp.zeros((H,), jnp.float32),
                             jnp.full((H,), jnp.pi / 2.0, jnp.float32)])  # (2H,)
    if k == 1:
        if hp != two_h:
            w_row = jnp.pad(w_row, (0, hp - two_h))
            p_row = jnp.pad(p_row, (0, hp - two_h))
        w_rows = w_row[None, :]                                           # (1, hp)
        p_full = p_row[None, :]                                           # (1, hp)
    else:
        # Row c holds w_row in lanes [c*2H, (c+1)*2H), zero elsewhere.
        w_rows = jnp.kron(jnp.eye(k, dtype=jnp.float32), w_row[None, :])  # (k, 128)
        p_full = jnp.tile(p_row, (k,))[None, :]                           # (1, 128)
    wp = jnp.concatenate([w_rows, p_full], axis=0)                        # (k+1, hp)

    # ---- tile sizing ---------------------------------------------------------
    n_rows = -(-N // k)                      # packed rows holding real data
    n_rows8 = _round_up(max(n_rows, 1), 8)

    if tile_rows is None:
        # ~4 MiB output block (x2 double-buffered ~= 8 MiB VMEM): well under
        # v5e's 16 MiB scoped default and v7x's 32 MiB scoped / 64 MiB physical.
        block_bytes = 4 * 1024 * 1024
        tile_rows = max(8, (block_bytes // (hp * 4) // 8) * 8)
    else:
        tile_rows = max(8, _round_up(int(tile_rows), 8))

    # v7x megacore: keep >= 2 grid tiles when there is enough work so both
    # TensorCores get a share (grid axis is "parallel"); no effect on v5e/v6e.
    if n_rows8 >= 16:
        tile_rows = min(tile_rows, max(8, _round_up(-(-n_rows8 // 2), 8)))
    tile_rows = min(tile_rows, n_rows8)

    n_pad_rows = _round_up(n_rows8, tile_rows)

    # ---- pack x into (n_pad_rows, k) ----------------------------------------
    x32 = x.astype(jnp.float32)
    total = n_pad_rows * k
    if total != N:
        x32 = jnp.pad(x32, (0, total - N))
    x2d = x32.reshape(n_pad_rows, k)

    out = pl.pallas_call(
        _make_gfp_kernel(k),
        out_shape=jax.ShapeDtypeStruct((n_pad_rows, hp), jnp.float32),
        grid=(n_pad_rows // tile_rows,),
        in_specs=[
            pl.BlockSpec((tile_rows, k), lambda i: (i, 0)),
            pl.BlockSpec((k + 1, hp), lambda i: (0, 0)),   # resident weights+phase
        ],
        out_specs=pl.BlockSpec((tile_rows, hp), lambda i: (i, 0)),
        compiler_params=pltpu.CompilerParams(
            dimension_semantics=("parallel",),
        ),
    )(x2d, wp)

    # ---- unpack / trim -------------------------------------------------------
    if k == 1:
        if n_pad_rows == N and hp == two_h:
            return out
        return out[:N, :two_h]
    out = out.reshape(n_pad_rows * k, two_h)   # free contiguous reshape
    if n_pad_rows * k == N:
        return out
    return out[:N]


def reference(x, W):
    x_proj = x[:, None] * W[None, :] * 2.0 * jnp.pi
    return jnp.concatenate([jnp.sin(x_proj), jnp.cos(x_proj)], axis=-1)


def _check(key, n, embed_dim, scale=30.0):
    kx, kw = jax.random.split(key)
    # Mirrors: torch.randn(embed_dim // 2) * scale (non-trainable parameter).
    W = jax.random.normal(kw, (embed_dim // 2,), dtype=jnp.float32) * scale
    x = jax.random.uniform(kx, (n,), dtype=jnp.float32)   # time steps
    out = jax.block_until_ready(gaussian_fourier_projection(x, W))
    ref = reference(x, W)
    assert out.shape == (n, 2 * (embed_dim // 2)), out.shape
    # 1e-3 tolerance: arguments reach ~|500| rad (scale=30), so the fused
    # sin(t + pi/2) / pre-folded 2*pi reassociation differs from the naive op
    # order by O(|t| * eps_f32) — f32-level range-reduction noise.
    assert jnp.allclose(out, ref, atol=1e-3, rtol=1e-3), (
        f"mismatch vs reference (N={n}, embed_dim={embed_dim})")
    return out


if __name__ == "__main__":
    key = jax.random.PRNGKey(0)
    k0, k1, k2 = jax.random.split(key, 3)

    # Shapes matching the module's typical use: x of shape (N,), embed_dim=32.
    _check(k0, n=8, embed_dim=32)      # packed path (k=4), single tile
    _check(k1, n=100, embed_dim=32)    # packed path, multi-tile + row padding
    _check(k2, n=40, embed_dim=200)    # fallback lane-padded path (k=1), multi-tile

    print("KERNEL_OK")
</pallas_src>

<mosaic_0001>
module attributes {stable_mosaic.version = 11 : i64} {
  func.func @kernel(%arg0: i32, %arg1: memref<8x4xf32, #tpu.memory_space<vmem>>, %arg2: memref<5x128xf32, #tpu.memory_space<vmem>>, %arg3: memref<8x128xf32, #tpu.memory_space<vmem>>) attributes {dimension_semantics = [#tpu.dimension_semantics<parallel>], iteration_bounds = array<i64: 1>, scalar_prefetch = 0 : i64, scratch_operands = 0 : i64, tpu.core_type = #tpu.core_type<tc>, window_params = [{transform_indices = @transform_0, window_bounds = array<i64: 8, 4>}, {pipeline_mode = #tpu.pipeline_mode<synchronous>, transform_indices = @transform_1, window_bounds = array<i64: 5, 128>}, {transform_indices = @transform_2, window_bounds = array<i64: 8, 128>}]} {
    %c0 = arith.constant 0 : index
    %c0_0 = arith.constant 0 : index
    %0 = vector.load %arg1[%c0, %c0_0] : memref<8x4xf32, #tpu.memory_space<vmem>>, vector<8x4xf32>
    %c4 = arith.constant 4 : index
    %c0_1 = arith.constant 0 : index
    %1 = vector.load %arg2[%c4, %c0_1] : memref<5x128xf32, #tpu.memory_space<vmem>>, vector<1x128xf32>
    %2 = vector.extract_strided_slice %0 {offsets = [0, 0], sizes = [8, 1], strides = [1, 1]} : vector<8x4xf32> to vector<8x1xf32>
    %c0_2 = arith.constant 0 : index
    %c0_3 = arith.constant 0 : index
    %3 = vector.load %arg2[%c0_2, %c0_3] : memref<5x128xf32, #tpu.memory_space<vmem>>, vector<1x128xf32>
    %4 = vector.broadcast %2 : vector<8x1xf32> to vector<8x128xf32>
    %5 = vector.broadcast %3 : vector<1x128xf32> to vector<8x128xf32>
    %6 = arith.mulf %4, %5 : vector<8x128xf32>
    %7 = vector.broadcast %1 : vector<1x128xf32> to vector<8x128xf32>
    %8 = arith.addf %7, %6 : vector<8x128xf32>
    %9 = vector.extract_strided_slice %0 {offsets = [0, 1], sizes = [8, 1], strides = [1, 1]} : vector<8x4xf32> to vector<8x1xf32>
    %c1 = arith.constant 1 : index
    %c0_4 = arith.constant 0 : index
    %10 = vector.load %arg2[%c1, %c0_4] : memref<5x128xf32, #tpu.memory_space<vmem>>, vector<1x128xf32>
    %11 = vector.broadcast %9 : vector<8x1xf32> to vector<8x128xf32>
    %12 = vector.broadcast %10 : vector<1x128xf32> to vector<8x128xf32>
    %13 = arith.mulf %11, %12 : vector<8x128xf32>
    %14 = arith.addf %8, %13 : vector<8x128xf32>
    %15 = vector.extract_strided_slice %0 {offsets = [0, 2], sizes = [8, 1], strides = [1, 1]} : vector<8x4xf32> to vector<8x1xf32>
    %c2 = arith.constant 2 : index
    %c0_5 = arith.constant 0 : index
    %16 = vector.load %arg2[%c2, %c0_5] : memref<5x128xf32, #tpu.memory_space<vmem>>, vector<1x128xf32>
    %17 = vector.broadcast %15 : vector<8x1xf32> to vector<8x128xf32>
    %18 = vector.broadcast %16 : vector<1x128xf32> to vector<8x128xf32>
    %19 = arith.mulf %17, %18 : vector<8x128xf32>
    %20 = arith.addf %14, %19 : vector<8x128xf32>
    %21 = vector.extract_strided_slice %0 {offsets = [0, 3], sizes = [8, 1], strides = [1, 1]} : vector<8x4xf32> to vector<8x1xf32>
    %c3 = arith.constant 3 : index
    %c0_6 = arith.constant 0 : index
    %22 = vector.load %arg2[%c3, %c0_6] : memref<5x128xf32, #tpu.memory_space<vmem>>, vector<1x128xf32>
    %23 = vector.broadcast %21 : vector<8x1xf32> to vector<8x128xf32>
    %24 = vector.broadcast %22 : vector<1x128xf32> to vector<8x128xf32>
    %25 = arith.mulf %23, %24 : vector<8x128xf32>
    %26 = arith.addf %20, %25 : vector<8x128xf32>
    %27 = math.sin %26 : vector<8x128xf32>
    %c0_7 = arith.constant 0 : index
    %c0_8 = arith.constant 0 : index
    %28 = vector.load %arg3[%c0_7, %c0_8] : memref<8x128xf32, #tpu.memory_space<vmem>>, vector<8x128xf32>
    tpu.vector_store %arg3[%c0_7, %c0_8], %27 {strides = array<i32>} : memref<8x128xf32, #tpu.memory_space<vmem>>, vector<8x128xf32>,
    return
  }
  func.func @transform_0(%arg0: i32) -> (i32, i32) {
    %c0_i32 = arith.constant 0 : i32
    %c0_i32_0 = arith.constant 0 : i32
    return %arg0, %c0_i32 : i32, i32
  }
  func.func @transform_1(%arg0: i32) -> (i32, i32) {
    %c0_i32 = arith.constant 0 : i32
    %c0_i32_0 = arith.constant 0 : i32
    %c0_i32_1 = arith.constant 0 : i32
    return %c0_i32, %c0_i32_0 : i32, i32
  }
  func.func @transform_2(%arg0: i32) -> (i32, i32) {
    %c0_i32 = arith.constant 0 : i32
    %c0_i32_0 = arith.constant 0 : i32
    return %arg0, %c0_i32 : i32, i32
  }
}

</mosaic_0001>

<llo_original>
// kernel: tpu_custom_call.1
$region0: #{tpu_custom_call.1}
  #allocation0 [shape = 'u32[]', space=smem, size = 0x4, offset = 0x4, fixed_abs, tag = 'smem constant byte address 0x4 - core index']
  #allocation1 [shape = 'u32[72,128]{1,0:T(1,128)}', space=vmem, size = 0x9000, scoped, tag = 'internal scratch']
  %s0 = inlined_call_operand.vmem [shape: f32[8,4], index: 0, kind: input, shape index: {}]
  %s1 = inlined_call_operand.vmem [shape: f32[5,128], index: 1, kind: input, shape index: {}]
  %s2 = inlined_call_operand.hbm [shape: f32[8,128], index: 2, kind: output, shape index: {}]
  %s3 = sld [smem:[#allocation0]]
  $region18: #{tpu_custom_call.1} parent=0
    _
  %s5 = ssub.s32 1, %s3
  %s6 = scalar_select 0, %s5, %s3
  $region1: #{tpu_custom_call.1} parent=0
    #allocation2 [shape = 'u8[4096]{0}', space=vmem, size = 0x1000, scoped, tag = 'output window, operand 0, single buffered']
    #allocation3 [shape = 's32[1]{0}', space=sflag, size = 0x4, scoped, tag = 'scoped memory for tpu_custom_call.1']
    %7 = vsyncpa [#allocation3], 0
    // Predicated region
    $region2: #{tpu_custom_call.1} parent=1 // pred_check
      _
    $region3: #{tpu_custom_call.1} parent=1 // pred_check_branch
      %9 = sbr.rel (0) target = $region5
    $region4: #{tpu_custom_call.1} parent=1 // pred_region
      _
    $region5: #{tpu_custom_call.1} parent=1 // pred_fallthru
      _
    // Predicated region
    $region6: #{tpu_custom_call.1} parent=1 // pred_check
      _
    $region7: #{tpu_custom_call.1} parent=1 // pred_check_branch
      %11 = sbr.rel (0) target = $region9
    $region8: #{tpu_custom_call.1} parent=1 // pred_region
      _
    $region9: #{tpu_custom_call.1} parent=1 // pred_fallthru
      _
    %v12 = vld [vmem:[%s0] sm:$0xff]
    %v13 = vld [vmem:[%s1 + $0x4] sm:$0x1]
    %v14 = vld [vmem:[%s1] sm:$0x1]
    %16 = vset.pattern.permute.xlu0 0
    %17 = vperm.xlu0 %16, %v12
    %v18 = vpop.permute.xlu0 %17
    %v20 = vperm.slane %v14, 0
    %v21 = vmul.f32 %v18, %v20
    %v22 = vperm.slane %v13, 0
    %v23 = vadd.f32 %v22, %v21
    %v24 = vld [vmem:[%s1 + $0x1] sm:$0x1]
    %25 = vset.pattern.permute.xlu0 1
    %26 = vperm.xlu0 %25, %v12
    %v27 = vpop.permute.xlu0 %26
    %v29 = vperm.slane %v24, 0
    %v30 = vmul.f32 %v27, %v29
    %v31 = vadd.f32 %v23, %v30
    %v32 = vld [vmem:[%s1 + $0x2] sm:$0x1]
    %33 = vset.pattern.permute.xlu0 2
    %34 = vperm.xlu0 %33, %v12
    %v35 = vpop.permute.xlu0 %34
    %v37 = vperm.slane %v32, 0
    %v38 = vmul.f32 %v35, %v37
    %v39 = vadd.f32 %v31, %v38
    %v40 = vld [vmem:[%s1 + $0x3] sm:$0x1]
    %41 = vset.pattern.permute.xlu0 3
    %42 = vperm.xlu0 %41, %v12
    %v43 = vpop.permute.xlu0 %42
    %v45 = vperm.slane %v40, 0
    %v46 = vmul.f32 %v43, %v45
    %v47 = vadd.f32 %v39, %v46
    %v48 = vand.u32 2147483647, %v47
    %vm49 = vcmp.le.f32.partialorder %v48, 0.7853982
    %vm50 = vcmp.lt.s32.totalorder %v47, 0
    %v51 = vand.u32 %v47, 2139095040
    %v52 = vshrl.u32 %v51, 23
    %v53 = vsub.s32 %v52, 127
    %v54 = vand.u32 2147483647, %v47
    %v55 = vand.u32 %v54, 8388607
    %v56 = vor.u32 %v55, 8388608
    %v57 = vsub.s32 0, %v56
    %v58 = vadd.s32 %v53, 1
    %vm59 = vcmp.gt.s32.totalorder %v58, 0
    %v60 = vsel %vm59, %v58, 0
    %v61 = vshrl.u32 %v60, 5
    %v62 = vand.u32 %v60, 31
    %v63 = vsub.s32 32, %v62
    %v64 = vshrl.u32 683565275, %v63
    %v65 = vshll.u32 683565275, %v62
    %v66 = vshrl.u32 2475754826, %v63
    %v67 = vor.u32 %v65, %v66
    %v68 = vshll.u32 2475754826, %v62
    %v69 = vshrl.u32 2131351028, %v63
    %v70 = vor.u32 %v68, %v69
    %v71 = vshll.u32 2131351028, %v62
    %v72 = vshrl.u32 2102212464, %v63
    %v73 = vor.u32 %v71, %v72
    %v74 = vshll.u32 2102212464, %v62
    %v75 = vshrl.u32 920167782, %v63
    %v76 = vor.u32 %v74, %v75
    %v77 = vshll.u32 920167782, %v62
    %v78 = vshrl.u32 1326507024, %v63
    %v79 = vor.u32 %v77, %v78
    %vm80 = vcmp.lt.s32.totalorder %v61, 1
    %vm81 = vcmp.lt.s32.totalorder %v61, 2
    %vm82 = vcmp.lt.s32.totalorder %v61, 3
    %vm83 = vcmp.lt.s32.totalorder %v61, 4
    %v84 = vsel %vm80, %v64, %v67
    %v85 = vsel %vm83, %v73, 2102212464
    %v86 = vsel %vm82, %v70, %v85
    %v87 = vsel %vm81, %v84, %v86
    %v88 = vsel %vm80, %v67, %v70
    %v89 = vsel %vm83, %v76, 920167782
    %v90 = vsel %vm82, %v73, %v89
    %v91 = vsel %vm81, %v88, %v90
    %v92 = vsel %vm80, %v70, %v73
    %v93 = vsel %vm83, %v79, 1326507024
    %v94 = vsel %vm82, %v76, %v93
    %v95 = vsel %vm81, %v92, %v94
    %v96 = vshll.u32 %v56, 8
    %v97 = vand.u32 %v96, 65535
    %v98 = vshrl.u32 %v96, 16
    %v99 = vand.u32 %v95, 65535
    %v100 = vshrl.u32 %v95, 16
    %v101 = vmul.u32 %v97, %v99
    %v102 = vmul.u32 %v97, %v100
    %v103 = vmul.u32 %v98, %v99
    %v104 = vmul.u32 %v98, %v100
    %v105 = vshll.u32 %v102, 16
    %v106 = vshrl.u32 %v102, 16
    %v107 = vshll.u32 %v103, 16
    %v108 = vshrl.u32 %v103, 16
    %vm109 = vc.u32 %v101, %v105
    %v110 = vsel %vm109, 1, 0
    %v111 = vadd.s32 %v101, %v105
    %v112 = vadd.s32 %v104, %v110
    %vm113 = vc.u32 %v111, %v107
    %v114 = vsel %vm113, 1, 0
    %v115 = vadd.s32 %v111, %v107
    %v116 = vadd.s32 %v112, %v114
    %v117 = vadd.s32 %v116, %v106
    %v118 = vadd.s32 %v117, %v108
    %v119 = vand.u32 %v96, 65535
    %v120 = vshrl.u32 %v96, 16
    %v121 = vand.u32 %v91, 65535
    %v122 = vshrl.u32 %v91, 16
    %v123 = vmul.u32 %v119, %v121
    %v124 = vmul.u32 %v119, %v122
    %v125 = vmul.u32 %v120, %v121
    %v126 = vmul.u32 %v120, %v122
    %v127 = vshll.u32 %v124, 16
    %v128 = vshrl.u32 %v124, 16
    %v129 = vshll.u32 %v125, 16
    %v130 = vshrl.u32 %v125, 16
    %vm131 = vc.u32 %v123, %v127
    %v132 = vsel %vm131, 1, 0
    %v133 = vadd.s32 %v123, %v127
    %v134 = vadd.s32 %v126, %v132
    %vm135 = vc.u32 %v133, %v129
    %v136 = vsel %vm135, 1, 0
    %v137 = vadd.s32 %v133, %v129
    %v138 = vadd.s32 %v134, %v136
    %v139 = vadd.s32 %v138, %v128
    %v140 = vadd.s32 %v139, %v130
    %v141 = vmul.u32 %v96, %v87
    %v142 = vadd.s32 %v118, %v137
    %vm143 = vc.u32 %v118, %v137
    %v144 = vadd.s32 %v140, 1
    %v145 = vsel %vm143, %v144, %v140
    %v146 = vadd.s32 %v141, %v145
    %v147 = vadd.s32 %v146, 536870912
    %v148 = vshrl.u32 %v147, 30
    %v149 = vshll.u32 %v148, 30
    %v150 = vsub.s32 %v146, %v149
    %vm151 = vcmp.lt.s32.totalorder %v150, 0
    %v152 = vsub.s32 0, %v150
    %v153 = vsel %vm151, %v152, %v150
    %v154 = vclz %v153
    %v155 = vsub.s32 %v154, 2
    %vm156 = vcmp.gt.s32.totalorder 0, %v155
    %v157 = vsel %vm156, 0, %v155
    %v158 = vsub.s32 32, %v157
    %v159 = vshll.u32 %v150, %v157
    %v160 = vshrl.u32 %v142, %v158
    %v161 = vor.u32 %v159, %v160
    %v162 = vsub.s32 4294967266, %v157
    %v163 = vadd.s32 %v162, 127
    %v164 = vshll.u32 %v163, 23
    %v165 = vor.u32 4788187, %v164
    %v166 = vand.u32 2147483647, %v165
    %v168 = vcvt.s32.f32 %v161
    %v169 = vmul.f32 %v168, %v166
    %v170 = vxor.u32 %v169, 2147483648
    %v171 = vsel %vm50, %v170, %v169
    %v172 = vsub.s32 4, %v148
    %v173 = vsel %vm50, %v172, %v148
    %v174 = vsel %vm49, %v47, %v171
    %v175 = vsel %vm49, 0, %v173
    %v176 = vmul.f32 %v174, %v174
    %v177 = vmul.f32 %v176, -0.001358992
    %v178 = vadd.f32 %v177, 0.041655596
    %v179 = vmul.f32 %v176, %v178
    %v180 = vadd.f32 %v179, -0.4999988
    %v181 = vmul.f32 %v176, %v180
    %v182 = vadd.f32 1.0, %v181
    %v183 = vmul.f32 %v174, %v174
    %v184 = vmul.f32 %v183, -0.00019511016
    %v185 = vadd.f32 %v184, 0.008332121
    %v186 = vmul.f32 %v183, %v185
    %v187 = vadd.f32 %v186, -0.16666654
    %v188 = vmul.f32 %v183, %v187
    %v189 = vadd.f32 %v188, 1.0
    %v190 = vmul.f32 %v189, %v174
    %vm191 = vweird.f32 %v47
    %v192 = vadd.s32 %v175, 3
    %v193 = vand.u32 %v192, 3
    %vm194 = vcmp.lt.s32.totalorder %v193, 2
    %vm195 = vcmp.eq.s32.totalorder %v193, 0
    %v196 = vxor.u32 %v190, 2147483648
    %v197 = vsel %vm195, %v182, %v196
    %vm198 = vcmp.eq.s32.totalorder %v193, 2
    %v199 = vxor.u32 %v182, 2147483648
    %v200 = vsel %vm198, %v199, %v190
    %v201 = vsel %vm194, %v197, %v200
    %v202 = vsel %vm191, nan, %v201
    %203 = vst [vmem:[#allocation2] sm:$0xff] %v202
    // Predicated region
    $region10: #{tpu_custom_call.1} parent=1 // pred_check
      _
    $region11: #{tpu_custom_call.1} parent=1 // pred_check_branch
      %205 = sbr.rel (0) target = $region13
    $region12: #{tpu_custom_call.1} parent=1 // pred_region
      %207 = vsyncadd [#allocation3], 0
      %s209 = sshll.u32 [#allocation2], 4
      %s210 = int_to_ptr.vmem [resolvable:$true] %s209
      %s211 = sshll.u32 %s2, 4
      %s212 = int_to_ptr.hbm [resolvable:$true] %s211
      %214 = dma.vmem_to_hbm [thread:$0]  %s210, 128, %s212, [#allocation3]
    $region13: #{tpu_custom_call.1} parent=1 // pred_fallthru
      _
    // Predicated region
    $region14: #{tpu_custom_call.1} parent=1 // pred_check
      _
    $region15: #{tpu_custom_call.1} parent=1 // pred_check_branch
      %216 = sbr.rel (0) target = $region17
    $region16: #{tpu_custom_call.1} parent=1 // pred_region
      %218 = dma.done [#allocation3], 128
    $region17: #{tpu_custom_call.1} parent=1 // pred_fallthru
      _
    %219 = vsyncpa [#allocation3], 1

</llo_original>
